<compile_context>
chip_gen: v7x
topology: tpu7x:2x2x1
jax: 0.10.0
libtpu: 0.0.40
codegen_flags: <defaults>
</compile_context>

<pallas_src>
import functools

import jax
import jax.numpy as jnp
from jax.experimental import pallas as pl
from jax.experimental.pallas import tpu as pltpu

_CHUNK = 512   # lanes per register-resident inner chunk (h1/h2 stay in vregs)
_HA = 40       # 32 features + 1 "ones" row for MXU bias folding, padded to x8


def qnet_kernel(x_ref, w1a_ref, w2a_ref, w3a_ref, o_ref):
    """One grid step: (1, TB) lanes of states -> (1, TB) Q-values.

    Augmented-affine formulation: every Linear (including its bias add) is an
    MXU matmul; a constant ones-row survives each layer via relu(1) = 1, so
    the only VPU work per chunk is the [x; 1] stack and the two ReLUs.
    """
    w1a = w1a_ref[...]          # (HA, 2)   cols = [w1 | b1], row 32 = [0, 1]
    w2a = w2a_ref[...]          # (HA, HA)  [w2 | b2 | 0]; row 32 passes ones
    w3a = w3a_ref[...]          # (8, HA)   row 0 = [w3 | b3 | 0...]
    mxu_dtype = w2a.dtype       # f32, or bf16 when use_bf16=True

    tb = x_ref.shape[1]
    nchunks = tb // _CHUNK                      # tb is always a multiple of _CHUNK
    ones = jnp.ones((1, _CHUNK), jnp.float32)   # hoisted out of the chunk loop

    def body(c, carry):
        start = pl.multiple_of(c * _CHUNK, _CHUNK)
        x = x_ref[:, pl.ds(start, _CHUNK)]                            # (1, CHUNK)
        xa = jnp.concatenate([x, ones], axis=0).astype(mxu_dtype)     # (2, CHUNK)

        # fc1 (+ b1) on the MXU, K=2; row 32 of h1 becomes the ones row.
        h1 = jnp.maximum(
            jnp.dot(w1a, xa, preferred_element_type=jnp.float32), 0.0)          # (HA, CHUNK)
        # fc2 (+ b2) on the MXU; ones row survives via relu(1)=1.
        h2 = jnp.maximum(
            jnp.dot(w2a, h1.astype(mxu_dtype),
                    preferred_element_type=jnp.float32), 0.0)                   # (HA, CHUNK)
        # fc3 (+ b3) on the MXU; row 0 of the (8, CHUNK) result is the answer.
        out = jnp.dot(w3a, h2.astype(mxu_dtype),
                      preferred_element_type=jnp.float32)                       # (8, CHUNK)

        o_ref[:, pl.ds(start, _CHUNK)] = out[0:1, :].astype(o_ref.dtype)
        return carry

    jax.lax.fori_loop(0, nchunks, body, 0, unroll=min(8, nchunks))


def _round_up(n, m):
    return ((n + m - 1) // m) * m


def pack_params(params, use_bf16=False):
    """Pack the six nn.Linear tensors into three augmented MXU operands."""
    f32 = jnp.float32
    w1 = params["fc1_w"].astype(f32)   # (32, 1)   (out, in)
    b1 = params["fc1_b"].astype(f32)   # (32,)
    w2 = params["fc2_w"].astype(f32)   # (32, 32)  (out, in)
    b2 = params["fc2_b"].astype(f32)   # (32,)
    w3 = params["fc3_w"].astype(f32)   # (1, 32)   (out, in)
    b3 = params["fc3_b"].astype(f32)   # (1,)

    # fc1: h1_aug = relu(W1A @ [x; 1]); row 32 yields the constant-1 row.
    w1a = jnp.zeros((_HA, 2), f32)
    w1a = w1a.at[:32, 0].set(w1[:, 0]).at[:32, 1].set(b1).at[32, 1].set(1.0)

    # fc2: h2_aug = relu(W2A @ h1_aug); col 32 folds b2, row 32 passes the ones row.
    w2a = jnp.zeros((_HA, _HA), f32)
    w2a = w2a.at[:32, :32].set(w2).at[:32, 32].set(b2).at[32, 32].set(1.0)

    # fc3: out = row0(W3A) @ h2_aug = w3 @ h2 + b3.
    w3a = jnp.zeros((8, _HA), f32)
    w3a = w3a.at[0, :32].set(w3[0, :]).at[0, 32].set(b3[0])

    if use_bf16:   # v6e/v7x option: bf16 MXU inputs, f32 accumulate (looser tol).
        w1a, w2a, w3a = (a.astype(jnp.bfloat16) for a in (w1a, w2a, w3a))
    return w1a, w2a, w3a


@functools.partial(jax.jit, static_argnames=("block_b", "use_bf16"))
def qnetwork_forward(x, params, *, block_b=16384, use_bf16=False):
    """x: (B, 1) float32, same convention as the torch module. Returns (B, 1)."""
    assert block_b >= _CHUNK and block_b % _CHUNK == 0
    w1a, w2a, w3a = pack_params(params, use_bf16)

    B = x.shape[0]
    # Lanes per grid step: always a multiple of _CHUNK so the in-kernel chunk
    # loop never leaves its block; capped at block_b.
    tb = min(block_b, _round_up(B, _CHUNK))

    xt = x.astype(jnp.float32).reshape(1, B)      # feature-major, lane-dense
    bp = B
    if B < tb:
        # Tiny batch: pad up to exactly one full block (cheap). Large batches
        # are passed unpadded — Pallas clips the partial last block itself, so
        # there is no full-array pad copy in the XLA prologue.
        bp = tb
        xt = jnp.zeros((1, tb), jnp.float32).at[:, :B].set(xt)

    grid = pl.cdiv(bp, tb)

    out = pl.pallas_call(
        qnet_kernel,
        out_shape=jax.ShapeDtypeStruct((1, bp), jnp.float32),
        grid_spec=pltpu.PrefetchScalarGridSpec(
            num_scalar_prefetch=0,
            grid=(grid,),
            in_specs=[
                pl.BlockSpec((1, tb), lambda i: (0, i)),      # x block (lane-dense)
                pl.BlockSpec((_HA, 2), lambda i: (0, 0)),     # W1A: VMEM-resident
                pl.BlockSpec((_HA, _HA), lambda i: (0, 0)),   # W2A: VMEM-resident
                pl.BlockSpec((8, _HA), lambda i: (0, 0)),     # W3A: VMEM-resident
            ],
            out_specs=pl.BlockSpec((1, tb), lambda i: (0, i)),
        ),
        compiler_params=pltpu.CompilerParams(
            # Batch blocks are independent -> shard across v7x's 2 TensorCores.
            dimension_semantics=("parallel",),
        ),
    )(xt, w1a, w2a, w3a)

    return out[0, :B].reshape(B, 1)


def init_params(key):
    """Deterministic init matching nn.Linear defaults (uniform +/- 1/sqrt(fan_in))."""
    ks = jax.random.split(key, 6)

    def u(kk, shape, fan_in):
        bound = 1.0 / jnp.sqrt(fan_in)
        return jax.random.uniform(kk, shape, jnp.float32, -bound, bound)

    return {
        "fc1_w": u(ks[0], (32, 1), 1.0),    # (out, in)
        "fc1_b": u(ks[1], (32,), 1.0),
        "fc2_w": u(ks[2], (32, 32), 32.0),  # (out, in)
        "fc2_b": u(ks[3], (32,), 32.0),
        "fc3_w": u(ks[4], (1, 32), 32.0),   # (out, in)
        "fc3_b": u(ks[5], (1,), 32.0),
    }


if __name__ == "__main__":
    key = jax.random.PRNGKey(0)
    pkey, xkey = jax.random.split(key)
    params = init_params(pkey)

    def ref_forward(xx):   # pure-JAX reference == torch forward
        h = jnp.maximum(xx @ params["fc1_w"].T + params["fc1_b"], 0.0)
        h = jnp.maximum(h @ params["fc2_w"].T + params["fc2_b"], 0.0)
        return h @ params["fc3_w"].T + params["fc3_b"]

    # Small batch (pads to a single 512-lane block), torch-style (B, 1) input.
    x = jax.random.normal(xkey, (8, 1), dtype=jnp.float32)
    out = jax.block_until_ready(qnetwork_forward(x, params))
    assert out.shape == (8, 1)
    assert jnp.allclose(out, ref_forward(x), atol=1e-4, rtol=1e-4), "mismatch (B=8)"

    # Multi-step grid with a partial tail block + in-kernel chunk loop.
    x2 = jax.random.normal(jax.random.PRNGKey(1), (1300, 1), dtype=jnp.float32)
    out2 = jax.block_until_ready(qnetwork_forward(x2, params, block_b=512))
    assert out2.shape == (1300, 1)
    assert jnp.allclose(out2, ref_forward(x2), atol=1e-4, rtol=1e-4), "mismatch (B=1300)"

    print("KERNEL_OK")
</pallas_src>

<mosaic_0001>
module attributes {stable_mosaic.version = 11 : i64} {
  func.func @qnet_kernel(%arg0: i32, %arg1: memref<1x512xf32, #tpu.memory_space<vmem>>, %arg2: memref<40x2xf32, #tpu.memory_space<vmem>>, %arg3: memref<40x40xf32, #tpu.memory_space<vmem>>, %arg4: memref<8x40xf32, #tpu.memory_space<vmem>>, %arg5: memref<1x512xf32, #tpu.memory_space<vmem>>) attributes {dimension_semantics = [#tpu.dimension_semantics<parallel>], iteration_bounds = array<i64: 1>, scalar_prefetch = 0 : i64, scratch_operands = 0 : i64, tpu.core_type = #tpu.core_type<tc>, window_params = [{transform_indices = @transform_0, window_bounds = array<i64: 1, 512>}, {pipeline_mode = #tpu.pipeline_mode<synchronous>, transform_indices = @transform_1, window_bounds = array<i64: 40, 2>}, {pipeline_mode = #tpu.pipeline_mode<synchronous>, transform_indices = @transform_2, window_bounds = array<i64: 40, 40>}, {pipeline_mode = #tpu.pipeline_mode<synchronous>, transform_indices = @transform_3, window_bounds = array<i64: 8, 40>}, {transform_indices = @transform_4, window_bounds = array<i64: 1, 512>}]} {
    %c0 = arith.constant 0 : index
    %c0_0 = arith.constant 0 : index
    %0 = vector.load %arg2[%c0, %c0_0] : memref<40x2xf32, #tpu.memory_space<vmem>>, vector<40x2xf32>
    %c0_1 = arith.constant 0 : index
    %c0_2 = arith.constant 0 : index
    %1 = vector.load %arg3[%c0_1, %c0_2] : memref<40x40xf32, #tpu.memory_space<vmem>>, vector<40x40xf32>
    %c0_3 = arith.constant 0 : index
    %c0_4 = arith.constant 0 : index
    %2 = vector.load %arg4[%c0_3, %c0_4] : memref<8x40xf32, #tpu.memory_space<vmem>>, vector<8x40xf32>
    %cst = arith.constant 1.000000e+00 : f32
    %3 = vector.broadcast %cst : f32 to vector<1x512xf32>
    %c0_i32 = arith.constant 0 : i32
    %c512_i32 = arith.constant 512 : i32
    %4 = arith.muli %c0_i32, %c512_i32 : i32
    %5 = tpu.assume_multiple %4, 512 : i32
    %c0_5 = arith.constant 0 : index
    %6 = arith.index_cast %5 : i32 to index
    %7 = vector.load %arg1[%c0_5, %6] : memref<1x512xf32, #tpu.memory_space<vmem>>, vector<1x512xf32>
    %8 = tpu.concatenate %7, %3 in 0 : vector<1x512xf32>, vector<1x512xf32> -> vector<2x512xf32>
    %cst_6 = arith.constant dense<0.000000e+00> : vector<40x512xf32>
    %9 = tpu.matmul %0, %8, %cst_6 {dimension_numbers = #tpu.dot_dimension_numbers<[1], [0], [0], [1], [0, 0, 1, 1], [], []>} : vector<40x2xf32>, vector<2x512xf32>, vector<40x512xf32> -> vector<40x512xf32>
    %cst_7 = arith.constant 0.000000e+00 : f32
    %10 = vector.broadcast %cst_7 : f32 to vector<40x512xf32>
    %11 = arith.maximumf %9, %10 : vector<40x512xf32>
    %cst_8 = arith.constant dense<0.000000e+00> : vector<40x512xf32>
    %12 = tpu.matmul %1, %11, %cst_8 {dimension_numbers = #tpu.dot_dimension_numbers<[1], [0], [0], [1], [0, 0, 1, 1], [], []>} : vector<40x40xf32>, vector<40x512xf32>, vector<40x512xf32> -> vector<40x512xf32>
    %cst_9 = arith.constant 0.000000e+00 : f32
    %13 = vector.broadcast %cst_9 : f32 to vector<40x512xf32>
    %14 = arith.maximumf %12, %13 : vector<40x512xf32>
    %cst_10 = arith.constant dense<0.000000e+00> : vector<8x512xf32>
    %15 = tpu.matmul %2, %14, %cst_10 {dimension_numbers = #tpu.dot_dimension_numbers<[1], [0], [0], [1], [0, 0, 1, 1], [], []>} : vector<8x40xf32>, vector<40x512xf32>, vector<8x512xf32> -> vector<8x512xf32>
    %16 = vector.extract_strided_slice %15 {offsets = [0, 0], sizes = [1, 512], strides = [1, 1]} : vector<8x512xf32> to vector<1x512xf32>
    %c0_11 = arith.constant 0 : index
    %17 = arith.index_cast %5 : i32 to index
    %18 = vector.load %arg5[%c0_11, %17] : memref<1x512xf32, #tpu.memory_space<vmem>>, vector<1x512xf32>
    tpu.vector_store %arg5[%c0_11, %17], %16 {strides = array<i32>} : memref<1x512xf32, #tpu.memory_space<vmem>>, vector<1x512xf32>,
    %c1_i32 = arith.constant 1 : i32
    return
  }
  func.func @transform_0(%arg0: i32) -> (i32, i32) {
    %c0_i32 = arith.constant 0 : i32
    %c0_i32_0 = arith.constant 0 : i32
    return %c0_i32, %arg0 : i32, i32
  }
  func.func @transform_1(%arg0: i32) -> (i32, i32) {
    %c0_i32 = arith.constant 0 : i32
    %c0_i32_0 = arith.constant 0 : i32
    %c0_i32_1 = arith.constant 0 : i32
    return %c0_i32, %c0_i32_0 : i32, i32
  }
  func.func @transform_2(%arg0: i32) -> (i32, i32) {
    %c0_i32 = arith.constant 0 : i32
    %c0_i32_0 = arith.constant 0 : i32
    %c0_i32_1 = arith.constant 0 : i32
    return %c0_i32, %c0_i32_0 : i32, i32
  }
  func.func @transform_3(%arg0: i32) -> (i32, i32) {
    %c0_i32 = arith.constant 0 : i32
    %c0_i32_0 = arith.constant 0 : i32
    %c0_i32_1 = arith.constant 0 : i32
    return %c0_i32, %c0_i32_0 : i32, i32
  }
  func.func @transform_4(%arg0: i32) -> (i32, i32) {
    %c0_i32 = arith.constant 0 : i32
    %c0_i32_0 = arith.constant 0 : i32
    return %c0_i32, %arg0 : i32, i32
  }
}

</mosaic_0001>

<llo_original>
// kernel: qnetwork_forward.1
$region0: #{qnetwork_forward.1}
  #allocation0 [shape = 'u32[]', space=smem, size = 0x4, offset = 0x4, fixed_abs, tag = 'smem constant byte address 0x4 - core index']
  #allocation1 [shape = 'u32[144,128]{1,0:T(1,128)}', space=vmem, size = 0x12000, scoped, tag = 'internal scratch']
  %s0 = inlined_call_operand.vmem [shape: f32[1,512], index: 0, kind: input, shape index: {}]
  %s1 = inlined_call_operand.vmem [shape: f32[40,2], index: 1, kind: input, shape index: {}]
  %s2 = inlined_call_operand.vmem [shape: f32[40,40], index: 2, kind: input, shape index: {}]
  %s3 = inlined_call_operand.vmem [shape: f32[8,40], index: 3, kind: input, shape index: {}]
  %s4 = inlined_call_operand.vmem [shape: f32[1,512], index: 4, kind: output, shape index: {}]
  %s5 = sld [smem:[#allocation0]]
  $region26: #{qnetwork_forward.1} parent=0
    _
  %s7 = ssub.s32 1, %s5
  %s8 = scalar_select 0, %s7, %s5
  // Predicated region
  $region2: #{qnetwork_forward.1} parent=0 // pred_check
    _
  $region3: #{qnetwork_forward.1} parent=0 // pred_check_branch
    %10 = sbr.rel (0) target = $region5
  $region4: #{qnetwork_forward.1} parent=0 // pred_region
    _
  $region5: #{qnetwork_forward.1} parent=0 // pred_fallthru
    _
  // Predicated region
  $region6: #{qnetwork_forward.1} parent=0 // pred_check
    _
  $region7: #{qnetwork_forward.1} parent=0 // pred_check_branch
    %12 = sbr.rel (0) target = $region9
  $region8: #{qnetwork_forward.1} parent=0 // pred_region
    _
  $region9: #{qnetwork_forward.1} parent=0 // pred_fallthru
    _
  // Predicated region
  $region10: #{qnetwork_forward.1} parent=0 // pred_check
    _
  $region11: #{qnetwork_forward.1} parent=0 // pred_check_branch
    %14 = sbr.rel (0) target = $region13
  $region12: #{qnetwork_forward.1} parent=0 // pred_region
    _
  $region13: #{qnetwork_forward.1} parent=0 // pred_fallthru
    _
  // Predicated region
  $region14: #{qnetwork_forward.1} parent=0 // pred_check
    _
  $region15: #{qnetwork_forward.1} parent=0 // pred_check_branch
    %16 = sbr.rel (0) target = $region17
  $region16: #{qnetwork_forward.1} parent=0 // pred_region
    _
  $region17: #{qnetwork_forward.1} parent=0 // pred_fallthru
    _
  %v17 = vld [vmem:[%s1] sm:$0xff]
  %v18 = vld [vmem:[%s1 + $0x8] sm:$0xff]
  %v19 = vld [vmem:[%s1 + $0x10] sm:$0xff]
  %v20 = vld [vmem:[%s1 + $0x18] sm:$0xff]
  %v21 = vld [vmem:[%s1 + $0x20] sm:$0xff]
  %v22 = vld [vmem:[%s2] sm:$0xff]
  %v23 = vld [vmem:[%s2 + $0x8] sm:$0xff]
  %v24 = vld [vmem:[%s2 + $0x10] sm:$0xff]
  %v25 = vld [vmem:[%s2 + $0x18] sm:$0xff]
  %v26 = vld [vmem:[%s2 + $0x20] sm:$0xff]
  %v27 = vld [vmem:[%s3] sm:$0xff]
  %v28 = vld [vmem:[%s0] sm:$0xf]
  %v30 = vlaneseq
  %v31 = vshrl.u32 %v30, 7
  %v32 = vsub.s32 0, %v31
  %v33 = vrot.slane %v28, %v32
  %v34 = vlaneseq
  %v35 = vshrl.u32 %v34, 7
  %v36 = vsub.s32 1, %v35
  %v37 = vrot.slane %v28, %v36
  %v38 = vlaneseq
  %v39 = vshrl.u32 %v38, 7
  %v40 = vsub.s32 2, %v39
  %v41 = vrot.slane %v28, %v40
  %v42 = vlaneseq
  %v43 = vshrl.u32 %v42, 7
  %v44 = vsub.s32 3, %v43
  %v45 = vrot.slane %v28, %v44
  %vm50 = vcmask 1040384
  %v51 = vsel %vm50, %v33, 1.0
  %v52 = vsel %vm50, %v37, 1.0
  %v53 = vsel %vm50, %v41, 1.0
  %v54 = vsel %vm50, %v45, 1.0
  %vm55 = vcmask 15360
  %v57 = vsel %vm55, %v17, 0
  %v60 = vsel %vm55, %v18, 0
  %v63 = vsel %vm55, %v19, 0
  %v66 = vsel %vm55, %v20, 0
  %v69 = vsel %vm55, %v21, 0
  %vm71 = vcmask 1041408
  %v73 = vsel %vm71, %v51, 0
  %v76 = vsel %vm71, %v52, 0
  %v79 = vsel %vm71, %v53, 0
  %v82 = vsel %vm71, %v54, 0
  %84 = vmatprep.subr.mxu0 %v76
  %85 = vmatpush1.msra.mxu0 %v73
  %86 = vmatprep.subr.mxu0 0.0
  %87 = vmatpush1.msra.mxu0 0.0
  %88 = vmatprep.subr.mxu0 0.0
  %89 = vmatpush1.msra.mxu0 0.0
  %90 = vmatprep.subr.mxu0 0.0
  %91 = vmatpush1.msra.mxu0 0.0
  %92 = vmatprep.subr.mxu0 0.0
  %93 = vmatpush1.msra.mxu0 0.0
  %94 = vmatprep.subr.mxu0 0.0
  %95 = vmatpush1.msra.mxu0 0.0
  %96 = vmatprep.subr.mxu0 0.0
  %97 = vmatpush1.msra.mxu0 0.0
  %98 = vmatprep.subr.mxu0 0.0
  %99 = vmatpush1.msra.mxu0 0.0
  %100 = vmatprep.subr.mxu0 0.0
  %101 = vmatpush1.msra.mxu0 0.0
  %102 = vmatprep.subr.mxu0 0.0
  %103 = vmatpush1.msra.mxu0 0.0
  %104 = vmatprep.subr.mxu0 0.0
  %105 = vmatpush1.msra.mxu0 0.0
  %106 = vmatprep.subr.mxu0 0.0
  %107 = vmatpush1.msra.mxu0 0.0
  %108 = vmatprep.subr.mxu0 0.0
  %109 = vmatpush1.msra.mxu0 0.0
  %110 = vmatprep.subr.mxu0 0.0
  %111 = vmatpush1.msra.mxu0 0.0
  %112 = vmatprep.subr.mxu0 0.0
  %113 = vmatpush1.msra.mxu0 0.0
  %114 = vmatprep.subr.mxu0 0.0
  %115 = vmatpush1.msra.mxu0 0.0
  %116 = vmatprep.subr.mxu0 0.0
  %117 = vmatpush1.msra.mxu0 0.0
  %118 = vmatprep.subr.mxu0 0.0
  %119 = vmatpush1.msra.mxu0 0.0
  %120 = vmatprep.subr.mxu0 0.0
  %121 = vmatpush1.msra.mxu0 0.0
  %122 = vmatprep.subr.mxu0 0.0
  %123 = vmatpush1.msra.mxu0 0.0
  %124 = vmatprep.subr.mxu0 0.0
  %125 = vmatpush1.msra.mxu0 0.0
  %126 = vmatprep.subr.mxu0 0.0
  %127 = vmatpush1.msra.mxu0 0.0
  %128 = vmatprep.subr.mxu0 0.0
  %129 = vmatpush1.msra.mxu0 0.0
  %130 = vmatprep.subr.mxu0 0.0
  %131 = vmatpush1.msra.mxu0 0.0
  %132 = vmatprep.subr.mxu0 0.0
  %133 = vmatpush1.msra.mxu0 0.0
  %134 = vmatprep.subr.mxu0 0.0
  %135 = vmatpush1.msra.mxu0 0.0
  %136 = vmatprep.subr.mxu0 0.0
  %137 = vmatpush1.msra.mxu0 0.0
  %138 = vmatprep.subr.mxu0 0.0
  %139 = vmatpush1.msra.mxu0 0.0
  %140 = vmatprep.subr.mxu0 0.0
  %141 = vmatpush1.msra.mxu0 0.0
  %142 = vmatprep.subr.mxu0 0.0
  %143 = vmatpush1.msra.mxu0 0.0
  %144 = vmatprep.subr.mxu0 0.0
  %145 = vmatpush1.msra.mxu0 0.0
  %146 = vmatprep.subr.mxu0 0.0
  %147 = vmatpush1.msra.mxu0 0.0
  %148 = vmatprep.mubr.f32.mxu0 0.0
  %149 = vmatmul.mubr.f32.gmra.mrb[0].mxu0 %v57
  %v150 = vpop.f32.mrb[0].mxu0
  %v151 = vadd.f32 0.0, %v150
  %v152 = vpop.f32.mrb[0].mxu0
  %v153 = vadd.f32 0.0, %v152
  %154 = vmatprep.mubr.f32.mxu0 0.0
  %155 = vmatmul.mubr.f32.gmra.mrb[0].mxu0 %v60
  %v156 = vpop.f32.mrb[0].mxu0
  %v157 = vadd.f32 0.0, %v156
  %v158 = vpop.f32.mrb[0].mxu0
  %v159 = vadd.f32 0.0, %v158
  %160 = vmatprep.mubr.f32.mxu0 0.0
  %161 = vmatmul.mubr.f32.gmra.mrb[0].mxu0 %v63
  %v162 = vpop.f32.mrb[0].mxu0
  %v163 = vadd.f32 0.0, %v162
  %v164 = vpop.f32.mrb[0].mxu0
  %v165 = vadd.f32 0.0, %v164
  %166 = vmatprep.mubr.f32.mxu0 0.0
  %167 = vmatmul.mubr.f32.gmra.mrb[0].mxu0 %v66
  %v168 = vpop.f32.mrb[0].mxu0
  %v169 = vadd.f32 0.0, %v168
  %v170 = vpop.f32.mrb[0].mxu0
  %v171 = vadd.f32 0.0, %v170
  %172 = vmatprep.mubr.f32.mxu0 0.0
  %173 = vmatmul.mubr.f32.gmra.mrb[0].mxu0 %v69
  %v174 = vpop.f32.mrb[0].mxu0
  %v175 = vadd.f32 0.0, %v174
  %v176 = vpop.f32.mrb[0].mxu0
  %v177 = vadd.f32 0.0, %v176
  %178 = vdwg.mxu0
  %179 = vmatprep.subr.mxu0 %v82
  %180 = vmatpush1.msra.mxu0 %v79
  %181 = vmatprep.subr.mxu0 0.0
  %182 = vmatpush1.msra.mxu0 0.0
  %183 = vmatprep.subr.mxu0 0.0
  %184 = vmatpush1.msra.mxu0 0.0
  %185 = vmatprep.subr.mxu0 0.0
  %186 = vmatpush1.msra.mxu0 0.0
  %187 = vmatprep.subr.mxu0 0.0
  %188 = vmatpush1.msra.mxu0 0.0
  %189 = vmatprep.subr.mxu0 0.0
  %190 = vmatpush1.msra.mxu0 0.0
  %191 = vmatprep.subr.mxu0 0.0
  %192 = vmatpush1.msra.mxu0 0.0
  %193 = vmatprep.subr.mxu0 0.0
  %194 = vmatpush1.msra.mxu0 0.0
  %195 = vmatprep.subr.mxu0 0.0
  %196 = vmatpush1.msra.mxu0 0.0
  %197 = vmatprep.subr.mxu0 0.0
  %198 = vmatpush1.msra.mxu0 0.0
  %199 = vmatprep.subr.mxu0 0.0
  %200 = vmatpush1.msra.mxu0 0.0
  %201 = vmatprep.subr.mxu0 0.0
  %202 = vmatpush1.msra.mxu0 0.0
  %203 = vmatprep.subr.mxu0 0.0
  %204 = vmatpush1.msra.mxu0 0.0
  %205 = vmatprep.subr.mxu0 0.0
  %206 = vmatpush1.msra.mxu0 0.0
  %207 = vmatprep.subr.mxu0 0.0
  %208 = vmatpush1.msra.mxu0 0.0
  %209 = vmatprep.subr.mxu0 0.0
  %210 = vmatpush1.msra.mxu0 0.0
  %211 = vmatprep.subr.mxu0 0.0
  %212 = vmatpush1.msra.mxu0 0.0
  %213 = vmatprep.subr.mxu0 0.0
  %214 = vmatpush1.msra.mxu0 0.0
  %215 = vmatprep.subr.mxu0 0.0
  %216 = vmatpush1.msra.mxu0 0.0
  %217 = vmatprep.subr.mxu0 0.0
  %218 = vmatpush1.msra.mxu0 0.0
  %219 = vmatprep.subr.mxu0 0.0
  %220 = vmatpush1.msra.mxu0 0.0
  %221 = vmatprep.subr.mxu0 0.0
  %222 = vmatpush1.msra.mxu0 0.0
  %223 = vmatprep.subr.mxu0 0.0
  %224 = vmatpush1.msra.mxu0 0.0
  %225 = vmatprep.subr.mxu0 0.0
  %226 = vmatpush1.msra.mxu0 0.0
  %227 = vmatprep.subr.mxu0 0.0
  %228 = vmatpush1.msra.mxu0 0.0
  %229 = vmatprep.subr.mxu0 0.0
  %230 = vmatpush1.msra.mxu0 0.0
  %231 = vmatprep.subr.mxu0 0.0
  %232 = vmatpush1.msra.mxu0 0.0
  %233 = vmatprep.subr.mxu0 0.0
  %234 = vmatpush1.msra.mxu0 0.0
  %235 = vmatprep.subr.mxu0 0.0
  %236 = vmatpush1.msra.mxu0 0.0
  %237 = vmatprep.subr.mxu0 0.0
  %238 = vmatpush1.msra.mxu0 0.0
  %239 = vmatprep.subr.mxu0 0.0
  %240 = vmatpush1.msra.mxu0 0.0
  %241 = vmatprep.subr.mxu0 0.0
  %242 = vmatpush1.msra.mxu0 0.0
  %243 = vmatprep.mubr.f32.mxu0 0.0
  %244 = vmatmul.mubr.f32.gmra.mrb[0].mxu0 %v57
  %v245 = vpop.f32.mrb[0].mxu0
  %v246 = vadd.f32 0.0, %v245
  %v247 = vpop.f32.mrb[0].mxu0
  %v248 = vadd.f32 0.0, %v247
  %249 = vmatprep.mubr.f32.mxu0 0.0
  %250 = vmatmul.mubr.f32.gmra.mrb[0].mxu0 %v60
  %v251 = vpop.f32.mrb[0].mxu0
  %v252 = vadd.f32 0.0, %v251
  %v253 = vpop.f32.mrb[0].mxu0
  %v254 = vadd.f32 0.0, %v253
  %255 = vmatprep.mubr.f32.mxu0 0.0
  %256 = vmatmul.mubr.f32.gmra.mrb[0].mxu0 %v63
  %v257 = vpop.f32.mrb[0].mxu0
  %v258 = vadd.f32 0.0, %v257
  %v259 = vpop.f32.mrb[0].mxu0
  %v260 = vadd.f32 0.0, %v259
  %261 = vmatprep.mubr.f32.mxu0 0.0
  %262 = vmatmul.mubr.f32.gmra.mrb[0].mxu0 %v66
  %v263 = vpop.f32.mrb[0].mxu0
  %v264 = vadd.f32 0.0, %v263
  %v265 = vpop.f32.mrb[0].mxu0
  %v266 = vadd.f32 0.0, %v265
  %267 = vmatprep.mubr.f32.mxu0 0.0
  %268 = vmatmul.mubr.f32.gmra.mrb[0].mxu0 %v69
  %v269 = vpop.f32.mrb[0].mxu0
  %v270 = vadd.f32 0.0, %v269
  %v271 = vpop.f32.mrb[0].mxu0
  %v272 = vadd.f32 0.0, %v271
  %273 = vdwg.mxu0
  %v274 = vmax.f32 %v151, 0.0
  %v275 = vmax.f32 %v153, 0.0
  %v276 = vmax.f32 %v246, 0.0
  %v277 = vmax.f32 %v248, 0.0
  %v278 = vmax.f32 %v157, 0.0
  %v279 = vmax.f32 %v159, 0.0
  %v280 = vmax.f32 %v252, 0.0
  %v281 = vmax.f32 %v254, 0.0
  %v282 = vmax.f32 %v163, 0.0
  %v283 = vmax.f32 %v165, 0.0
  %v284 = vmax.f32 %v258, 0.0
  %v285 = vmax.f32 %v260, 0.0
  %v286 = vmax.f32 %v169, 0.0
  %v287 = vmax.f32 %v171, 0.0
  %v288 = vmax.f32 %v264, 0.0
  %v289 = vmax.f32 %v266, 0.0
  %v290 = vmax.f32 %v175, 0.0
  %v291 = vmax.f32 %v177, 0.0
  %v292 = vmax.f32 %v270, 0.0
  %v293 = vmax.f32 %v272, 0.0
  %vm294 = vcmask 326656
  %v296 = vsel %vm294, %v22, 0
  %v299 = vsel %vm294, %v23, 0
  %v302 = vsel %vm294, %v24, 0
  %v305 = vsel %vm294, %v25, 0
  %v308 = vsel %vm294, %v26, 0
  %310 = vmatprep.subr.mxu0 %v275
  %311 = vmatpush1.msra.mxu0 %v274
  %312 = vmatprep.subr.mxu0 %v279
  %313 = vmatpush1.msra.mxu0 %v278
  %314 = vmatprep.subr.mxu0 %v283
  %315 = vmatpush1.msra.mxu0 %v282
  %316 = vmatprep.subr.mxu0 %v287
  %317 = vmatpush1.msra.mxu0 %v286
  %318 = vmatprep.subr.mxu0 %v291
  %319 = vmatpush1.msra.mxu0 %v290
  %320 = vmatprep.subr.mxu0 0.0
  %321 = vmatpush1.msra.mxu0 0.0
  %322 = vmatprep.subr.mxu0 0.0
  %323 = vmatpush1.msra.mxu0 0.0
  %324 = vmatprep.subr.mxu0 0.0
  %325 = vmatpush1.msra.mxu0 0.0
  %326 = vmatprep.subr.mxu0 0.0
  %327 = vmatpush1.msra.mxu0 0.0
  %328 = vmatprep.subr.mxu0 0.0
  %329 = vmatpush1.msra.mxu0 0.0
  %330 = vmatprep.subr.mxu0 0.0
  %331 = vmatpush1.msra.mxu0 0.0
  %332 = vmatprep.subr.mxu0 0.0
  %333 = vmatpush1.msra.mxu0 0.0
  %334 = vmatprep.subr.mxu0 0.0
  %335 = vmatpush1.msra.mxu0 0.0
  %336 = vmatprep.subr.mxu0 0.0
  %337 = vmatpush1.msra.mxu0 0.0
  %338 = vmatprep.subr.mxu0 0.0
  %339 = vmatpush1.msra.mxu0 0.0
  %340 = vmatprep.subr.mxu0 0.0
  %341 = vmatpush1.msra.mxu0 0.0
  %342 = vmatprep.subr.mxu0 0.0
  %343 = vmatpush1.msra.mxu0 0.0
  %344 = vmatprep.subr.mxu0 0.0
  %345 = vmatpush1.msra.mxu0 0.0
  %346 = vmatprep.subr.mxu0 0.0
  %347 = vmatpush1.msra.mxu0 0.0
  %348 = vmatprep.subr.mxu0 0.0
  %349 = vmatpush1.msra.mxu0 0.0
  %350 = vmatprep.subr.mxu0 0.0
  %351 = vmatpush1.msra.mxu0 0.0
  %352 = vmatprep.subr.mxu0 0.0
  %353 = vmatpush1.msra.mxu0 0.0
  %354 = vmatprep.subr.mxu0 0.0
  %355 = vmatpush1.msra.mxu0 0.0
  %356 = vmatprep.subr.mxu0 0.0
  %357 = vmatpush1.msra.mxu0 0.0
  %358 = vmatprep.subr.mxu0 0.0
  %359 = vmatpush1.msra.mxu0 0.0
  %360 = vmatprep.subr.mxu0 0.0
  %361 = vmatpush1.msra.mxu0 0.0
  %362 = vmatprep.subr.mxu0 0.0
  %363 = vmatpush1.msra.mxu0 0.0
  %364 = vmatprep.subr.mxu0 0.0
  %365 = vmatpush1.msra.mxu0 0.0
  %366 = vmatprep.subr.mxu0 0.0
  %367 = vmatpush1.msra.mxu0 0.0
  %368 = vmatprep.subr.mxu0 0.0
  %369 = vmatpush1.msra.mxu0 0.0
  %370 = vmatprep.subr.mxu0 0.0
  %371 = vmatpush1.msra.mxu0 0.0
  %372 = vmatprep.subr.mxu0 0.0
  %373 = vmatpush1.msra.mxu0 0.0
  %374 = vmatprep.mubr.f32.mxu0 0.0
  %375 = vmatmul.mubr.f32.gmra.mrb[0].mxu0 %v296
  %v376 = vpop.f32.mrb[0].mxu0
  %v377 = vadd.f32 0.0, %v376
  %v378 = vpop.f32.mrb[0].mxu0
  %v379 = vadd.f32 0.0, %v378
  %380 = vmatprep.mubr.f32.mxu0 0.0
  %381 = vmatmul.mubr.f32.gmra.mrb[0].mxu0 %v299
  %v382 = vpop.f32.mrb[0].mxu0
  %v383 = vadd.f32 0.0, %v382
  %v384 = vpop.f32.mrb[0].mxu0
  %v385 = vadd.f32 0.0, %v384
  %386 = vmatprep.mubr.f32.mxu0 0.0
  %387 = vmatmul.mubr.f32.gmra.mrb[0].mxu0 %v302
  %v388 = vpop.f32.mrb[0].mxu0
  %v389 = vadd.f32 0.0, %v388
  %v390 = vpop.f32.mrb[0].mxu0
  %v391 = vadd.f32 0.0, %v390
  %392 = vmatprep.mubr.f32.mxu0 0.0
  %393 = vmatmul.mubr.f32.gmra.mrb[0].mxu0 %v305
  %v394 = vpop.f32.mrb[0].mxu0
  %v395 = vadd.f32 0.0, %v394
  %v396 = vpop.f32.mrb[0].mxu0
  %v397 = vadd.f32 0.0, %v396
  %398 = vmatprep.mubr.f32.mxu0 0.0
  %399 = vmatmul.mubr.f32.gmra.mrb[0].mxu0 %v308
  %v400 = vpop.f32.mrb[0].mxu0
  %v401 = vadd.f32 0.0, %v400
  %v402 = vpop.f32.mrb[0].mxu0
  %v403 = vadd.f32 0.0, %v402
  %404 = vdwg.mxu0
  %405 = vmatprep.subr.mxu0 %v277
  %406 = vmatpush1.msra.mxu0 %v276
  %407 = vmatprep.subr.mxu0 %v281
  %408 = vmatpush1.msra.mxu0 %v280
  %409 = vmatprep.subr.mxu0 %v285
  %410 = vmatpush1.msra.mxu0 %v284
  %411 = vmatprep.subr.mxu0 %v289
  %412 = vmatpush1.msra.mxu0 %v288
  %413 = vmatprep.subr.mxu0 %v293
  %414 = vmatpush1.msra.mxu0 %v292
  %415 = vmatprep.subr.mxu0 0.0
  %416 = vmatpush1.msra.mxu0 0.0
  %417 = vmatprep.subr.mxu0 0.0
  %418 = vmatpush1.msra.mxu0 0.0
  %419 = vmatprep.subr.mxu0 0.0
  %420 = vmatpush1.msra.mxu0 0.0
  %421 = vmatprep.subr.mxu0 0.0
  %422 = vmatpush1.msra.mxu0 0.0
  %423 = vmatprep.subr.mxu0 0.0
  %424 = vmatpush1.msra.mxu0 0.0
  %425 = vmatprep.subr.mxu0 0.0
  %426 = vmatpush1.msra.mxu0 0.0
  %427 = vmatprep.subr.mxu0 0.0
  %428 = vmatpush1.msra.mxu0 0.0
  %429 = vmatprep.subr.mxu0 0.0
  %430 = vmatpush1.msra.mxu0 0.0
  %431 = vmatprep.subr.mxu0 0.0
  %432 = vmatpush1.msra.mxu0 0.0
  %433 = vmatprep.subr.mxu0 0.0
  %434 = vmatpush1.msra.mxu0 0.0
  %435 = vmatprep.subr.mxu0 0.0
  %436 = vmatpush1.msra.mxu0 0.0
  %437 = vmatprep.subr.mxu0 0.0
  %438 = vmatpush1.msra.mxu0 0.0
  %439 = vmatprep.subr.mxu0 0.0
  %440 = vmatpush1.msra.mxu0 0.0
  %441 = vmatprep.subr.mxu0 0.0
  %442 = vmatpush1.msra.mxu0 0.0
  %443 = vmatprep.subr.mxu0 0.0
  %444 = vmatpush1.msra.mxu0 0.0
  %445 = vmatprep.subr.mxu0 0.0
  %446 = vmatpush1.msra.mxu0 0.0
  %447 = vmatprep.subr.mxu0 0.0
  %448 = vmatpush1.msra.mxu0 0.0
  %449 = vmatprep.subr.mxu0 0.0
  %450 = vmatpush1.msra.mxu0 0.0
  %451 = vmatprep.subr.mxu0 0.0
  %452 = vmatpush1.msra.mxu0 0.0
  %453 = vmatprep.subr.mxu0 0.0
  %454 = vmatpush1.msra.mxu0 0.0
  %455 = vmatprep.subr.mxu0 0.0
  %456 = vmatpush1.msra.mxu0 0.0
  %457 = vmatprep.subr.mxu0 0.0
  %458 = vmatpush1.msra.mxu0 0.0
  %459 = vmatprep.subr.mxu0 0.0
  %460 = vmatpush1.msra.mxu0 0.0
  %461 = vmatprep.subr.mxu0 0.0
  %462 = vmatpush1.msra.mxu0 0.0
  %463 = vmatprep.subr.mxu0 0.0
  %464 = vmatpush1.msra.mxu0 0.0
  %465 = vmatprep.subr.mxu0 0.0
  %466 = vmatpush1.msra.mxu0 0.0
  %467 = vmatprep.subr.mxu0 0.0
  %468 = vmatpush1.msra.mxu0 0.0
  %469 = vmatprep.mubr.f32.mxu0 0.0
  %470 = vmatmul.mubr.f32.gmra.mrb[0].mxu0 %v296
  %v471 = vpop.f32.mrb[0].mxu0
  %v472 = vadd.f32 0.0, %v471
  %v473 = vpop.f32.mrb[0].mxu0
  %v474 = vadd.f32 0.0, %v473
  %475 = vmatprep.mubr.f32.mxu0 0.0
  %476 = vmatmul.mubr.f32.gmra.mrb[0].mxu0 %v299
  %v477 = vpop.f32.mrb[0].mxu0
  %v478 = vadd.f32 0.0, %v477
  %v479 = vpop.f32.mrb[0].mxu0
  %v480 = vadd.f32 0.0, %v479
  %481 = vmatprep.mubr.f32.mxu0 0.0
  %482 = vmatmul.mubr.f32.gmra.mrb[0].mxu0 %v302
  %v483 = vpop.f32.mrb[0].mxu0
  %v484 = vadd.f32 0.0, %v483
  %v485 = vpop.f32.mrb[0].mxu0
  %v486 = vadd.f32 0.0, %v485
  %487 = vmatprep.mubr.f32.mxu0 0.0
  %488 = vmatmul.mubr.f32.gmra.mrb[0].mxu0 %v305
  %v489 = vpop.f32.mrb[0].mxu0
  %v490 = vadd.f32 0.0, %v489
  %v491 = vpop.f32.mrb[0].mxu0
  %v492 = vadd.f32 0.0, %v491
  %493 = vmatprep.mubr.f32.mxu0 0.0
  %494 = vmatmul.mubr.f32.gmra.mrb[0].mxu0 %v308
  %v495 = vpop.f32.mrb[0].mxu0
  %v496 = vadd.f32 0.0, %v495
  %v497 = vpop.f32.mrb[0].mxu0
  %v498 = vadd.f32 0.0, %v497
  %499 = vdwg.mxu0
  %v500 = vmax.f32 %v377, 0.0
  %v501 = vmax.f32 %v379, 0.0
  %v502 = vmax.f32 %v472, 0.0
  %v503 = vmax.f32 %v474, 0.0
  %v504 = vmax.f32 %v383, 0.0
  %v505 = vmax.f32 %v385, 0.0
  %v506 = vmax.f32 %v478, 0.0
  %v507 = vmax.f32 %v480, 0.0
  %v508 = vmax.f32 %v389, 0.0
  %v509 = vmax.f32 %v391, 0.0
  %v510 = vmax.f32 %v484, 0.0
  %v511 = vmax.f32 %v486, 0.0
  %v512 = vmax.f32 %v395, 0.0
  %v513 = vmax.f32 %v397, 0.0
  %v514 = vmax.f32 %v490, 0.0
  %v515 = vmax.f32 %v492, 0.0
  %v516 = vmax.f32 %v401, 0.0
  %v517 = vmax.f32 %v403, 0.0
  %v518 = vmax.f32 %v496, 0.0
  %v519 = vmax.f32 %v498, 0.0
  %v521 = vsel %vm294, %v27, 0
  %523 = vmatprep.subr.mxu0 %v501
  %524 = vmatpush1.msra.mxu0 %v500
  %525 = vmatprep.subr.mxu0 %v505
  %526 = vmatpush1.msra.mxu0 %v504
  %527 = vmatprep.subr.mxu0 %v509
  %528 = vmatpush1.msra.mxu0 %v508
  %529 = vmatprep.subr.mxu0 %v513
  %530 = vmatpush1.msra.mxu0 %v512
  %531 = vmatprep.subr.mxu0 %v517
  %532 = vmatpush1.msra.mxu0 %v516
  %533 = vmatprep.subr.mxu0 0.0
  %534 = vmatpush1.msra.mxu0 0.0
  %535 = vmatprep.subr.mxu0 0.0
  %536 = vmatpush1.msra.mxu0 0.0
  %537 = vmatprep.subr.mxu0 0.0
  %538 = vmatpush1.msra.mxu0 0.0
  %539 = vmatprep.subr.mxu0 0.0
  %540 = vmatpush1.msra.mxu0 0.0
  %541 = vmatprep.subr.mxu0 0.0
  %542 = vmatpush1.msra.mxu0 0.0
  %543 = vmatprep.subr.mxu0 0.0
  %544 = vmatpush1.msra.mxu0 0.0
  %545 = vmatprep.subr.mxu0 0.0
  %546 = vmatpush1.msra.mxu0 0.0
  %547 = vmatprep.subr.mxu0 0.0
  %548 = vmatpush1.msra.mxu0 0.0
  %549 = vmatprep.subr.mxu0 0.0
  %550 = vmatpush1.msra.mxu0 0.0
  %551 = vmatprep.subr.mxu0 0.0
  %552 = vmatpush1.msra.mxu0 0.0
  %553 = vmatprep.subr.mxu0 0.0
  %554 = vmatpush1.msra.mxu0 0.0
  %555 = vmatprep.subr.mxu0 0.0
  %556 = vmatpush1.msra.mxu0 0.0
  %557 = vmatprep.subr.mxu0 0.0
  %558 = vmatpush1.msra.mxu0 0.0
  %559 = vmatprep.subr.mxu0 0.0
  %560 = vmatpush1.msra.mxu0 0.0
  %561 = vmatprep.subr.mxu0 0.0
  %562 = vmatpush1.msra.mxu0 0.0
  %563 = vmatprep.subr.mxu0 0.0
  %564 = vmatpush1.msra.mxu0 0.0
  %565 = vmatprep.subr.mxu0 0.0
  %566 = vmatpush1.msra.mxu0 0.0
  %567 = vmatprep.subr.mxu0 0.0
  %568 = vmatpush1.msra.mxu0 0.0
  %569 = vmatprep.subr.mxu0 0.0
  %570 = vmatpush1.msra.mxu0 0.0
  %571 = vmatprep.subr.mxu0 0.0
  %572 = vmatpush1.msra.mxu0 0.0
  %573 = vmatprep.subr.mxu0 0.0
  %574 = vmatpush1.msra.mxu0 0.0
  %575 = vmatprep.subr.mxu0 0.0
  %576 = vmatpush1.msra.mxu0 0.0
  %577 = vmatprep.subr.mxu0 0.0
  %578 = vmatpush1.msra.mxu0 0.0
  %579 = vmatprep.subr.mxu0 0.0
  %580 = vmatpush1.msra.mxu0 0.0
  %581 = vmatprep.subr.mxu0 0.0
  %582 = vmatpush1.msra.mxu0 0.0
  %583 = vmatprep.subr.mxu0 0.0
  %584 = vmatpush1.msra.mxu0 0.0
  %585 = vmatprep.subr.mxu0 0.0
  %586 = vmatpush1.msra.mxu0 0.0
  %587 = vmatprep.mubr.f32.mxu0 0.0
  %588 = vmatmul.mubr.f32.gmra.mrb[0].mxu0 %v521
  %v589 = vpop.f32.mrb[0].mxu0
  %v590 = vadd.f32 0.0, %v589
  %v591 = vpop.f32.mrb[0].mxu0
  %v592 = vadd.f32 0.0, %v591
  %593 = vdwg.mxu0
  %594 = vmatprep.subr.mxu0 %v503
  %595 = vmatpush1.msra.mxu0 %v502
  %596 = vmatprep.subr.mxu0 %v507
  %597 = vmatpush1.msra.mxu0 %v506
  %598 = vmatprep.subr.mxu0 %v511
  %599 = vmatpush1.msra.mxu0 %v510
  %600 = vmatprep.subr.mxu0 %v515
  %601 = vmatpush1.msra.mxu0 %v514
  %602 = vmatprep.subr.mxu0 %v519
  %603 = vmatpush1.msra.mxu0 %v518
  %604 = vmatprep.subr.mxu0 0.0
  %605 = vmatpush1.msra.mxu0 0.0
  %606 = vmatprep.subr.mxu0 0.0
  %607 = vmatpush1.msra.mxu0 0.0
  %608 = vmatprep.subr.mxu0 0.0
  %609 = vmatpush1.msra.mxu0 0.0
  %610 = vmatprep.subr.mxu0 0.0
  %611 = vmatpush1.msra.mxu0 0.0
  %612 = vmatprep.subr.mxu0 0.0
  %613 = vmatpush1.msra.mxu0 0.0
  %614 = vmatprep.subr.mxu0 0.0
  %615 = vmatpush1.msra.mxu0 0.0
  %616 = vmatprep.subr.mxu0 0.0
  %617 = vmatpush1.msra.mxu0 0.0
  %618 = vmatprep.subr.mxu0 0.0
  %619 = vmatpush1.msra.mxu0 0.0
  %620 = vmatprep.subr.mxu0 0.0
  %621 = vmatpush1.msra.mxu0 0.0
  %622 = vmatprep.subr.mxu0 0.0
  %623 = vmatpush1.msra.mxu0 0.0
  %624 = vmatprep.subr.mxu0 0.0
  %625 = vmatpush1.msra.mxu0 0.0
  %626 = vmatprep.subr.mxu0 0.0
  %627 = vmatpush1.msra.mxu0 0.0
  %628 = vmatprep.subr.mxu0 0.0
  %629 = vmatpush1.msra.mxu0 0.0
  %630 = vmatprep.subr.mxu0 0.0
  %631 = vmatpush1.msra.mxu0 0.0
  %632 = vmatprep.subr.mxu0 0.0
  %633 = vmatpush1.msra.mxu0 0.0
  %634 = vmatprep.subr.mxu0 0.0
  %635 = vmatpush1.msra.mxu0 0.0
  %636 = vmatprep.subr.mxu0 0.0
  %637 = vmatpush1.msra.mxu0 0.0
  %638 = vmatprep.subr.mxu0 0.0
  %639 = vmatpush1.msra.mxu0 0.0
  %640 = vmatprep.subr.mxu0 0.0
  %641 = vmatpush1.msra.mxu0 0.0
  %642 = vmatprep.subr.mxu0 0.0
  %643 = vmatpush1.msra.mxu0 0.0
  %644 = vmatprep.subr.mxu0 0.0
  %645 = vmatpush1.msra.mxu0 0.0
  %646 = vmatprep.subr.mxu0 0.0
  %647 = vmatpush1.msra.mxu0 0.0
  %648 = vmatprep.subr.mxu0 0.0
  %649 = vmatpush1.msra.mxu0 0.0
  %650 = vmatprep.subr.mxu0 0.0
  %651 = vmatpush1.msra.mxu0 0.0
  %652 = vmatprep.subr.mxu0 0.0
  %653 = vmatpush1.msra.mxu0 0.0
  %654 = vmatprep.subr.mxu0 0.0
  %655 = vmatpush1.msra.mxu0 0.0
  %656 = vmatprep.subr.mxu0 0.0
  %657 = vmatpush1.msra.mxu0 0.0
  %658 = vmatprep.mubr.f32.mxu0 0.0
  %659 = vmatmul.mubr.f32.gmra.mrb[0].mxu0 %v521
  %v660 = vpop.f32.mrb[0].mxu0
  %v661 = vadd.f32 0.0, %v660
  %v662 = vpop.f32.mrb[0].mxu0
  %v663 = vadd.f32 0.0, %v662
  %664 = vdwg.mxu0
  %v669 = vcombine.low %v590, %v592
  %v670 = vcombine.low %v661, %v663
  %v672 = vunpack.c.l.s4 1966171168
  %v673 = vunpack.c.0.s8 %v672
  %v674 = vlaneseq
  %v675 = vshrl.u32 %v674, 7
  %v676 = vsub.s32 %v673, %v675
  %v677 = vrot.slane %v669, %v676
  %v679 = vunpack.c.l.s4 1966171168
  %v680 = vunpack.c.0.s8 %v679
  %v681 = vlaneseq
  %v682 = vshrl.u32 %v681, 7
  %v683 = vsub.s32 %v680, %v682
  %v684 = vrot.slane %v670, %v683
  %v685 = vcombine.low %v677, %v684
  %v687 = vunpack.c.l.s4 1966171168
  %v688 = vunpack.c.0.s8 %v687
  %v689 = vlaneseq
  %v690 = vshrl.u32 %v689, 7
  %v691 = vsub.s32 %v688, %v690
  %v692 = vrot.slane %v685, %v691
  %v694 = vlaneseq
  %vm695 = vcmp.ge.s32.totalorder %v694, 0
  %vm696 = vcmp.lt.s32.totalorder %v694, 512
  %vm697 = vmand %vm695, %vm696
  %698 = vst.msk [vmem:[%s4] sm:$0xf] %vm697, %v692
  // Predicated region
  $region18: #{qnetwork_forward.1} parent=0 // pred_check
    _
  $region19: #{qnetwork_forward.1} parent=0 // pred_check_branch
    %700 = sbr.rel (0) target = $region21
  $region20: #{qnetwork_forward.1} parent=0 // pred_region
    _
  $region21: #{qnetwork_forward.1} parent=0 // pred_fallthru
    _
  // Predicated region
  $region22: #{qnetwork_forward.1} parent=0 // pred_check
    _
  $region23: #{qnetwork_forward.1} parent=0 // pred_check_branch
    %702 = sbr.rel (0) target = $region25
  $region24: #{qnetwork_forward.1} parent=0 // pred_region
    _
  $region25: #{qnetwork_forward.1} parent=0 // pred_fallthru
    _

</llo_original>
